<compile_context>
chip_gen: v6e
topology: v6e:2x2x1
jax: 0.10.0
libtpu: 0.0.40
codegen_flags: <defaults>
</compile_context>

<pallas_src>
import jax
import jax.numpy as jnp
from jax.experimental import pallas as pl
from jax.experimental.pallas import tpu as pltpu

LANE = 128        # hidden feature dims padded to a full 128-lane vreg width
OUT_PAD = 8       # output dim (3) padded only to one sublane group of cols
OUT_FEATURES = 3
HIDDEN1 = 20
HIDDEN2 = 40


def mlp_kernel(x_ref, w1_ref, b1_ref, w2_ref, b2_ref, w3_ref, b3_ref, o_ref):
    # One batch tile per grid step; weights/biases are VMEM-resident.
    x = x_ref[...]                                                   # (TB, D)
    h1 = jnp.tanh(
        jnp.dot(x, w1_ref[...], preferred_element_type=jnp.float32)
        + b1_ref[...])                                               # (TB, 128)
    h2 = jnp.tanh(
        jnp.dot(h1, w2_ref[...], preferred_element_type=jnp.float32)
        + b2_ref[...])                                               # (TB, 128)
    o_ref[...] = (
        jnp.dot(h2, w3_ref[...], preferred_element_type=jnp.float32)
        + b3_ref[...])                                               # (TB, 8)


def _round_up(n, m):
    return ((n + m - 1) // m) * m


def _pad2(a, rows, cols):
    return jnp.pad(a, ((0, rows - a.shape[0]), (0, cols - a.shape[1])))


def _choose_batch_tile(B):
    tb = _round_up(B, 8)
    if tb <= 256:
        return tb                      # one / few blocks; tiny problem
    # >=4 grid steps (both v7x TensorCores get >=2 blocks), 128-row multiple,
    # capped at 1024 rows (x/out double-buffered tiles stay << scoped VMEM).
    tb = _round_up(pl.cdiv(B, 4), 128)
    return max(128, min(tb, 1024))


def pad_params(params):
    """One-time padding (outside jit): hidden dims -> 128 lanes, out dim -> 8."""
    D = params["w1"].shape[0]
    return {
        "w1": _pad2(params["w1"], D, LANE),
        "b1": _pad2(params["b1"], 1, LANE),
        "w2": _pad2(params["w2"], LANE, LANE),
        "b2": _pad2(params["b2"], 1, LANE),
        "w3": _pad2(params["w3"], LANE, OUT_PAD),
        "b3": _pad2(params["b3"], 1, OUT_PAD),
    }


@jax.jit
def network_forward(x, padded):
    """x: (B, inp_shape) f32; padded: dict from pad_params()."""
    B, D = x.shape
    TB = _choose_batch_tile(B)
    grid = (pl.cdiv(B, TB),)          # no x padding; partial block is masked

    # Advisory cost estimate for XLA's scheduler.
    flops = 2 * B * (D * LANE + LANE * LANE + LANE * OUT_PAD)
    transcendentals = 2 * B * LANE
    bytes_accessed = 4 * (B * (D + OUT_PAD)                 # x in, out
                          + D * LANE + LANE * LANE + LANE * OUT_PAD  # weights
                          + 2 * LANE + OUT_PAD)              # biases

    def resident(a):  # full-array block, same block index every grid step
        return pl.BlockSpec(a.shape, lambda i: (0, 0))

    out = pl.pallas_call(
        mlp_kernel,
        out_shape=jax.ShapeDtypeStruct((B, OUT_PAD), jnp.float32),
        grid=grid,
        in_specs=[
            pl.BlockSpec((TB, D), lambda i: (i, 0)),   # x: batch-tiled
            resident(padded["w1"]), resident(padded["b1"]),
            resident(padded["w2"]), resident(padded["b2"]),
            resident(padded["w3"]), resident(padded["b3"]),
        ],
        out_specs=pl.BlockSpec((TB, OUT_PAD), lambda i: (i, 0)),
        compiler_params=pltpu.CompilerParams(
            dimension_semantics=("parallel",),
        ),
        cost_estimate=pl.CostEstimate(
            flops=flops,
            transcendentals=transcendentals,
            bytes_accessed=bytes_accessed,
        ),
    )(x, padded["w1"], padded["b1"], padded["w2"], padded["b2"],
      padded["w3"], padded["b3"])

    return out[:, :OUT_FEATURES]


def init_params(key, inp_shape):
    """PyTorch nn.Linear default init; stored transposed as (in, out)."""
    dims = [(inp_shape, HIDDEN1), (HIDDEN1, HIDDEN2), (HIDDEN2, OUT_FEATURES)]
    params = {}
    for i, (fan_in, fan_out) in enumerate(dims, start=1):
        key, kw, kb = jax.random.split(key, 3)
        bound = 1.0 / jnp.sqrt(fan_in)
        w = jax.random.uniform(kw, (fan_in, fan_out), jnp.float32, -bound, bound)
        b = jax.random.uniform(kb, (1, fan_out), jnp.float32, -bound, bound)
        params[f"w{i}"] = w
        params[f"b{i}"] = b
    return params


def reference_forward(x, params):
    h1 = jnp.tanh(x @ params["w1"] + params["b1"])
    h2 = jnp.tanh(h1 @ params["w2"] + params["b2"])
    return h2 @ params["w3"] + params["b3"]


if __name__ == "__main__":
    key = jax.random.PRNGKey(0)
    k_x, k_p = jax.random.split(key)

    batch, inp_shape = 8, 32
    x = jax.random.normal(k_x, (batch, inp_shape), dtype=jnp.float32)
    params = init_params(k_p, inp_shape)
    padded = pad_params(params)   # one-time padding, outside the jitted forward

    out = network_forward(x, padded)
    out = jax.block_until_ready(out)

    ref = reference_forward(x, params)
    assert out.shape == (batch, 3)
    assert jnp.allclose(out, ref, atol=1e-5, rtol=1e-5)

    print("KERNEL_OK")
</pallas_src>

<mosaic_0001>
module attributes {stable_mosaic.version = 11 : i64} {
  func.func @mlp_kernel(%arg0: i32, %arg1: memref<8x32xf32, #tpu.memory_space<vmem>>, %arg2: memref<32x128xf32, #tpu.memory_space<vmem>>, %arg3: memref<1x128xf32, #tpu.memory_space<vmem>>, %arg4: memref<128x128xf32, #tpu.memory_space<vmem>>, %arg5: memref<1x128xf32, #tpu.memory_space<vmem>>, %arg6: memref<128x8xf32, #tpu.memory_space<vmem>>, %arg7: memref<1x8xf32, #tpu.memory_space<vmem>>, %arg8: memref<8x8xf32, #tpu.memory_space<vmem>>) attributes {dimension_semantics = [#tpu.dimension_semantics<parallel>], iteration_bounds = array<i64: 1>, scalar_prefetch = 0 : i64, scratch_operands = 0 : i64, tpu.core_type = #tpu.core_type<tc>, window_params = [{transform_indices = @transform_0, window_bounds = array<i64: 8, 32>}, {pipeline_mode = #tpu.pipeline_mode<synchronous>, transform_indices = @transform_1, window_bounds = array<i64: 32, 128>}, {pipeline_mode = #tpu.pipeline_mode<synchronous>, transform_indices = @transform_2, window_bounds = array<i64: 1, 128>}, {pipeline_mode = #tpu.pipeline_mode<synchronous>, transform_indices = @transform_3, window_bounds = array<i64: 128, 128>}, {pipeline_mode = #tpu.pipeline_mode<synchronous>, transform_indices = @transform_4, window_bounds = array<i64: 1, 128>}, {pipeline_mode = #tpu.pipeline_mode<synchronous>, transform_indices = @transform_5, window_bounds = array<i64: 128, 8>}, {pipeline_mode = #tpu.pipeline_mode<synchronous>, transform_indices = @transform_6, window_bounds = array<i64: 1, 8>}, {transform_indices = @transform_7, window_bounds = array<i64: 8, 8>}]} {
    %c0 = arith.constant 0 : index
    %c0_0 = arith.constant 0 : index
    %0 = vector.load %arg1[%c0, %c0_0] : memref<8x32xf32, #tpu.memory_space<vmem>>, vector<8x32xf32>
    %c0_1 = arith.constant 0 : index
    %c0_2 = arith.constant 0 : index
    %1 = vector.load %arg2[%c0_1, %c0_2] : memref<32x128xf32, #tpu.memory_space<vmem>>, vector<32x128xf32>
    %cst = arith.constant dense<0.000000e+00> : vector<8x128xf32>
    %2 = tpu.matmul %0, %1, %cst {dimension_numbers = #tpu.dot_dimension_numbers<[1], [0], [0], [1], [0, 0, 1, 1], [], []>} : vector<8x32xf32>, vector<32x128xf32>, vector<8x128xf32> -> vector<8x128xf32>
    %c0_3 = arith.constant 0 : index
    %c0_4 = arith.constant 0 : index
    %3 = vector.load %arg3[%c0_3, %c0_4] : memref<1x128xf32, #tpu.memory_space<vmem>>, vector<1x128xf32>
    %4 = vector.broadcast %3 : vector<1x128xf32> to vector<8x128xf32>
    %5 = arith.addf %2, %4 : vector<8x128xf32>
    %6 = math.tanh %5 : vector<8x128xf32>
    %c0_5 = arith.constant 0 : index
    %c0_6 = arith.constant 0 : index
    %7 = vector.load %arg4[%c0_5, %c0_6] : memref<128x128xf32, #tpu.memory_space<vmem>>, vector<128x128xf32>
    %cst_7 = arith.constant dense<0.000000e+00> : vector<8x128xf32>
    %8 = tpu.matmul %6, %7, %cst_7 {dimension_numbers = #tpu.dot_dimension_numbers<[1], [0], [0], [1], [0, 0, 1, 1], [], []>} : vector<8x128xf32>, vector<128x128xf32>, vector<8x128xf32> -> vector<8x128xf32>
    %c0_8 = arith.constant 0 : index
    %c0_9 = arith.constant 0 : index
    %9 = vector.load %arg5[%c0_8, %c0_9] : memref<1x128xf32, #tpu.memory_space<vmem>>, vector<1x128xf32>
    %10 = vector.broadcast %9 : vector<1x128xf32> to vector<8x128xf32>
    %11 = arith.addf %8, %10 : vector<8x128xf32>
    %12 = math.tanh %11 : vector<8x128xf32>
    %c0_10 = arith.constant 0 : index
    %c0_11 = arith.constant 0 : index
    %13 = vector.load %arg6[%c0_10, %c0_11] : memref<128x8xf32, #tpu.memory_space<vmem>>, vector<128x8xf32>
    %cst_12 = arith.constant dense<0.000000e+00> : vector<8x8xf32>
    %14 = tpu.matmul %12, %13, %cst_12 {dimension_numbers = #tpu.dot_dimension_numbers<[1], [0], [0], [1], [0, 0, 1, 1], [], []>} : vector<8x128xf32>, vector<128x8xf32>, vector<8x8xf32> -> vector<8x8xf32>
    %c0_13 = arith.constant 0 : index
    %c0_14 = arith.constant 0 : index
    %15 = vector.load %arg7[%c0_13, %c0_14] : memref<1x8xf32, #tpu.memory_space<vmem>>, vector<1x8xf32>
    %16 = vector.broadcast %15 : vector<1x8xf32> to vector<8x8xf32>
    %17 = arith.addf %14, %16 : vector<8x8xf32>
    %c0_15 = arith.constant 0 : index
    %c0_16 = arith.constant 0 : index
    %18 = vector.load %arg8[%c0_15, %c0_16] : memref<8x8xf32, #tpu.memory_space<vmem>>, vector<8x8xf32>
    tpu.vector_store %arg8[%c0_15, %c0_16], %17 {strides = array<i32>} : memref<8x8xf32, #tpu.memory_space<vmem>>, vector<8x8xf32>,
    return
  }
  func.func @transform_0(%arg0: i32) -> (i32, i32) {
    %c0_i32 = arith.constant 0 : i32
    %c0_i32_0 = arith.constant 0 : i32
    return %arg0, %c0_i32 : i32, i32
  }
  func.func @transform_1(%arg0: i32) -> (i32, i32) {
    %c0_i32 = arith.constant 0 : i32
    %c0_i32_0 = arith.constant 0 : i32
    %c0_i32_1 = arith.constant 0 : i32
    return %c0_i32, %c0_i32_0 : i32, i32
  }
  func.func @transform_2(%arg0: i32) -> (i32, i32) {
    %c0_i32 = arith.constant 0 : i32
    %c0_i32_0 = arith.constant 0 : i32
    %c0_i32_1 = arith.constant 0 : i32
    return %c0_i32, %c0_i32_0 : i32, i32
  }
  func.func @transform_3(%arg0: i32) -> (i32, i32) {
    %c0_i32 = arith.constant 0 : i32
    %c0_i32_0 = arith.constant 0 : i32
    %c0_i32_1 = arith.constant 0 : i32
    return %c0_i32, %c0_i32_0 : i32, i32
  }
  func.func @transform_4(%arg0: i32) -> (i32, i32) {
    %c0_i32 = arith.constant 0 : i32
    %c0_i32_0 = arith.constant 0 : i32
    %c0_i32_1 = arith.constant 0 : i32
    return %c0_i32, %c0_i32_0 : i32, i32
  }
  func.func @transform_5(%arg0: i32) -> (i32, i32) {
    %c0_i32 = arith.constant 0 : i32
    %c0_i32_0 = arith.constant 0 : i32
    %c0_i32_1 = arith.constant 0 : i32
    return %c0_i32, %c0_i32_0 : i32, i32
  }
  func.func @transform_6(%arg0: i32) -> (i32, i32) {
    %c0_i32 = arith.constant 0 : i32
    %c0_i32_0 = arith.constant 0 : i32
    %c0_i32_1 = arith.constant 0 : i32
    return %c0_i32, %c0_i32_0 : i32, i32
  }
  func.func @transform_7(%arg0: i32) -> (i32, i32) {
    %c0_i32 = arith.constant 0 : i32
    %c0_i32_0 = arith.constant 0 : i32
    return %arg0, %c0_i32 : i32, i32
  }
}

</mosaic_0001>

<llo_original>
// kernel: network_forward.1
$region0: #{network_forward.1}
  #allocation0 [shape = 'u32[]', space=smem, size = 0x4, offset = 0x4, fixed_abs, tag = 'smem constant byte address 0x4 - core index']
  #allocation1 [shape = 'u32[144,128]{1,0:T(1,128)}', space=vmem, size = 0x12000, scoped, tag = 'internal scratch']
  %s0 = inlined_call_operand.vmem [shape: f32[8,32], index: 0, kind: input, shape index: {}]
  %s1 = inlined_call_operand.hbm [shape: f32[32,128], index: 1, kind: input, shape index: {}]
  %s2 = inlined_call_operand.vmem [shape: f32[1,128], index: 2, kind: input, shape index: {}]
  %s3 = inlined_call_operand.vmem [shape: f32[128,128], index: 3, kind: input, shape index: {}]
  %s4 = inlined_call_operand.vmem [shape: f32[1,128], index: 4, kind: input, shape index: {}]
  %s5 = inlined_call_operand.vmem [shape: f32[128,8], index: 5, kind: input, shape index: {}]
  %s6 = inlined_call_operand.hbm [shape: f32[1,8], index: 6, kind: input, shape index: {}]
  %s7 = inlined_call_operand.vmem [shape: f32[8,8], index: 7, kind: output, shape index: {}]
  %s8 = sld [smem:[#allocation0]]
  $region46: #{network_forward.1} parent=0
    _
  %s10 = ssub.s32 1, %s8
  %s11 = scalar_select 0, %s10, %s8
  $region1: #{network_forward.1} parent=0
    #allocation2 [shape = 'u8[16384]{0}', space=vmem, size = 0x4000, scoped, tag = 'input window, operand 1, single buffered']
    #allocation3 [shape = 's32[1]{0}', space=sflag, size = 0x4, scoped, tag = 'scoped memory for network_forward.1']
    #allocation4 [shape = 'u8[512]{0}', space=vmem, size = 0x400, scoped, tag = 'input window, operand 6, single buffered']
    #allocation5 [shape = 's32[1]{0}', space=sflag, size = 0x4, scoped, tag = 'scoped memory for network_forward.1']
    %12 = vsyncpa [#allocation3], 0
    %13 = vsyncpa [#allocation5], 0
    // Predicated region
    $region2: #{network_forward.1} parent=1 // pred_check
      _
    $region3: #{network_forward.1} parent=1 // pred_check_branch
      %15 = sbr.rel (0) target = $region5
    $region4: #{network_forward.1} parent=1 // pred_region
      _
    $region5: #{network_forward.1} parent=1 // pred_fallthru
      _
    // Predicated region
    $region6: #{network_forward.1} parent=1 // pred_check
      _
    $region7: #{network_forward.1} parent=1 // pred_check_branch
      %17 = sbr.rel (0) target = $region9
    $region8: #{network_forward.1} parent=1 // pred_region
      %s19 = ssub.s32 512, 512
      %20 = vsyncadd [#allocation3], %s19
      %s21 = sshll.u32 [#allocation2], 4
      %s22 = int_to_ptr.vmem [resolvable:$true] %s21
      %27 = dma.hbm_to_vmem [thread:$0]  %s1, 512, %s22, [#allocation3], 128, 128, 8
    $region9: #{network_forward.1} parent=1 // pred_fallthru
      _
    // Predicated region
    $region10: #{network_forward.1} parent=1 // pred_check
      _
    $region11: #{network_forward.1} parent=1 // pred_check_branch
      %29 = sbr.rel (0) target = $region13
    $region12: #{network_forward.1} parent=1 // pred_region
      _
    $region13: #{network_forward.1} parent=1 // pred_fallthru
      _
    // Predicated region
    $region14: #{network_forward.1} parent=1 // pred_check
      _
    $region15: #{network_forward.1} parent=1 // pred_check_branch
      %31 = sbr.rel (0) target = $region17
    $region16: #{network_forward.1} parent=1 // pred_region
      _
    $region17: #{network_forward.1} parent=1 // pred_fallthru
      _
    // Predicated region
    $region18: #{network_forward.1} parent=1 // pred_check
      _
    $region19: #{network_forward.1} parent=1 // pred_check_branch
      %33 = sbr.rel (0) target = $region21
    $region20: #{network_forward.1} parent=1 // pred_region
      _
    $region21: #{network_forward.1} parent=1 // pred_fallthru
      _
    // Predicated region
    $region22: #{network_forward.1} parent=1 // pred_check
      _
    $region23: #{network_forward.1} parent=1 // pred_check_branch
      %35 = sbr.rel (0) target = $region25
    $region24: #{network_forward.1} parent=1 // pred_region
      _
    $region25: #{network_forward.1} parent=1 // pred_fallthru
      _
    // Predicated region
    $region26: #{network_forward.1} parent=1 // pred_check
      _
    $region27: #{network_forward.1} parent=1 // pred_check_branch
      %37 = sbr.rel (0) target = $region29
    $region28: #{network_forward.1} parent=1 // pred_region
      %s39 = ssub.s32 16, 16
      %40 = vsyncadd [#allocation5], %s39
      %s42 = sshll.u32 [#allocation4], 4
      %s43 = int_to_ptr.vmem [resolvable:$true] %s42
      %45 = dma.hbm_to_vmem [thread:$0]  %s6, 16, %s43, [#allocation5]
    $region29: #{network_forward.1} parent=1 // pred_fallthru
      _
    // Predicated region
    $region30: #{network_forward.1} parent=1 // pred_check
      _
    $region31: #{network_forward.1} parent=1 // pred_check_branch
      %47 = sbr.rel (0) target = $region33
    $region32: #{network_forward.1} parent=1 // pred_region
      %48 = dma.done [#allocation3], 512
    $region33: #{network_forward.1} parent=1 // pred_fallthru
      _
    // Predicated region
    $region34: #{network_forward.1} parent=1 // pred_check
      _
    $region35: #{network_forward.1} parent=1 // pred_check_branch
      %50 = sbr.rel (0) target = $region37
    $region36: #{network_forward.1} parent=1 // pred_region
      %51 = dma.done [#allocation5], 16
    $region37: #{network_forward.1} parent=1 // pred_fallthru
      _
    %v52 = vld [vmem:[%s0] sm:$0xff]
    %v53 = vld [vmem:[#allocation2] sm:$0xff]
    %v54 = vld [vmem:[#allocation2 + $0x8] sm:$0xff]
    %v55 = vld [vmem:[#allocation2 + $0x10] sm:$0xff]
    %v56 = vld [vmem:[#allocation2 + $0x18] sm:$0xff]
    %v57 = vld [vmem:[%s2] sm:$0x1]
    %v59 = vlaneseq
    %v60 = vshrl.u32 %v59, 7
    %v61 = vsub.s32 0, %v60
    %v62 = vrot.slane %v57, %v61
    %vm64 = vcmask 261120
    %v66 = vsel %vm64, %v52, 0
    %68 = vmatprep.subr.mxu0 0.0
    %69 = vmatpush1.msra.mxu0 0.0
    %70 = vmatprep.subr.mxu0 0.0
    %71 = vmatpush1.msra.mxu0 0.0
    %72 = vmatprep.subr.mxu0 0.0
    %73 = vmatpush1.msra.mxu0 0.0
    %74 = vmatprep.subr.mxu0 0.0
    %75 = vmatpush1.msra.mxu0 0.0
    %76 = vmatprep.subr.mxu0 0.0
    %77 = vmatpush1.msra.mxu0 0.0
    %78 = vmatprep.subr.mxu0 0.0
    %79 = vmatpush1.msra.mxu0 0.0
    %80 = vmatprep.subr.mxu0 0.0
    %81 = vmatpush1.msra.mxu0 0.0
    %82 = vmatprep.subr.mxu0 0.0
    %83 = vmatpush1.msra.mxu0 0.0
    %84 = vmatprep.subr.mxu0 0.0
    %85 = vmatpush1.msra.mxu0 0.0
    %86 = vmatprep.subr.mxu0 0.0
    %87 = vmatpush1.msra.mxu0 0.0
    %88 = vmatprep.subr.mxu0 0.0
    %89 = vmatpush1.msra.mxu0 0.0
    %90 = vmatprep.subr.mxu0 0.0
    %91 = vmatpush1.msra.mxu0 0.0
    %92 = vmatprep.subr.mxu0 0.0
    %93 = vmatpush1.msra.mxu0 %v56
    %94 = vmatprep.subr.mxu0 0.0
    %95 = vmatpush1.msra.mxu0 %v55
    %96 = vmatprep.subr.mxu0 0.0
    %97 = vmatpush1.msra.mxu0 %v54
    %98 = vmatprep.subr.mxu0 0.0
    %99 = vmatpush1.msra.mxu0 %v53
    %100 = vmatprep.subr.mxu0 0.0
    %101 = vmatpush2.msra.mxu0 0.0
    %102 = vmatprep.subr.mxu0 0.0
    %103 = vmatpush2.msra.mxu0 0.0
    %104 = vmatprep.subr.mxu0 0.0
    %105 = vmatpush2.msra.mxu0 0.0
    %106 = vmatprep.subr.mxu0 0.0
    %107 = vmatpush2.msra.mxu0 0.0
    %108 = vmatprep.subr.mxu0 0.0
    %109 = vmatpush2.msra.mxu0 0.0
    %110 = vmatprep.subr.mxu0 0.0
    %111 = vmatpush2.msra.mxu0 0.0
    %112 = vmatprep.subr.mxu0 0.0
    %113 = vmatpush2.msra.mxu0 0.0
    %114 = vmatprep.subr.mxu0 0.0
    %115 = vmatpush2.msra.mxu0 0.0
    %116 = vmatprep.subr.mxu0 0.0
    %117 = vmatpush2.msra.mxu0 0.0
    %118 = vmatprep.subr.mxu0 0.0
    %119 = vmatpush2.msra.mxu0 0.0
    %120 = vmatprep.subr.mxu0 0.0
    %121 = vmatpush2.msra.mxu0 0.0
    %122 = vmatprep.subr.mxu0 0.0
    %123 = vmatpush2.msra.mxu0 0.0
    %124 = vmatprep.subr.mxu0 0.0
    %125 = vmatpush2.msra.mxu0 0.0
    %126 = vmatprep.subr.mxu0 0.0
    %127 = vmatpush2.msra.mxu0 0.0
    %128 = vmatprep.subr.mxu0 0.0
    %129 = vmatpush2.msra.mxu0 0.0
    %130 = vmatprep.subr.mxu0 0.0
    %131 = vmatpush2.msra.mxu0 0.0
    %132 = vmatprep.mubr.f32.mxu0 0.0
    %133 = vmatmul.mubr.f32.gmra.mxu0 %v66
    %v134 = vpop.f32.mrf.mxu0
    %v135 = vadd.f32 %v62, %v134
    %v136 = vpop.f32.mrf.mxu0
    %137 = vdwg.mxu0
    %v138 = vtanh.pop %v135
    %v139 = vld [vmem:[%s3] sm:$0xff]
    %v140 = vld [vmem:[%s3 + $0x8] sm:$0xff]
    %v141 = vld [vmem:[%s3 + $0x10] sm:$0xff]
    %v142 = vld [vmem:[%s3 + $0x18] sm:$0xff]
    %v143 = vld [vmem:[%s3 + $0x20] sm:$0xff]
    %v144 = vld [vmem:[%s3 + $0x28] sm:$0xff]
    %v145 = vld [vmem:[%s3 + $0x30] sm:$0xff]
    %v146 = vld [vmem:[%s3 + $0x38] sm:$0xff]
    %v147 = vld [vmem:[%s3 + $0x40] sm:$0xff]
    %v148 = vld [vmem:[%s3 + $0x48] sm:$0xff]
    %v149 = vld [vmem:[%s3 + $0x50] sm:$0xff]
    %v150 = vld [vmem:[%s3 + $0x58] sm:$0xff]
    %v151 = vld [vmem:[%s3 + $0x60] sm:$0xff]
    %v152 = vld [vmem:[%s3 + $0x68] sm:$0xff]
    %v153 = vld [vmem:[%s3 + $0x70] sm:$0xff]
    %v154 = vld [vmem:[%s3 + $0x78] sm:$0xff]
    %v155 = vld [vmem:[%s4] sm:$0x1]
    %v157 = vlaneseq
    %v158 = vshrl.u32 %v157, 7
    %v159 = vsub.s32 0, %v158
    %v160 = vrot.slane %v155, %v159
    %162 = vmatprep.subr.mxu0 0.0
    %163 = vmatpush1.msra.mxu0 %v154
    %164 = vmatprep.subr.mxu0 0.0
    %165 = vmatpush1.msra.mxu0 %v153
    %166 = vmatprep.subr.mxu0 0.0
    %167 = vmatpush1.msra.mxu0 %v152
    %168 = vmatprep.subr.mxu0 0.0
    %169 = vmatpush1.msra.mxu0 %v151
    %170 = vmatprep.subr.mxu0 0.0
    %171 = vmatpush1.msra.mxu0 %v150
    %172 = vmatprep.subr.mxu0 0.0
    %173 = vmatpush1.msra.mxu0 %v149
    %174 = vmatprep.subr.mxu0 0.0
    %175 = vmatpush1.msra.mxu0 %v148
    %176 = vmatprep.subr.mxu0 0.0
    %177 = vmatpush1.msra.mxu0 %v147
    %178 = vmatprep.subr.mxu0 0.0
    %179 = vmatpush1.msra.mxu0 %v146
    %180 = vmatprep.subr.mxu0 0.0
    %181 = vmatpush1.msra.mxu0 %v145
    %182 = vmatprep.subr.mxu0 0.0
    %183 = vmatpush1.msra.mxu0 %v144
    %184 = vmatprep.subr.mxu0 0.0
    %185 = vmatpush1.msra.mxu0 %v143
    %186 = vmatprep.subr.mxu0 0.0
    %187 = vmatpush1.msra.mxu0 %v142
    %188 = vmatprep.subr.mxu0 0.0
    %189 = vmatpush1.msra.mxu0 %v141
    %190 = vmatprep.subr.mxu0 0.0
    %191 = vmatpush1.msra.mxu0 %v140
    %192 = vmatprep.subr.mxu0 0.0
    %193 = vmatpush1.msra.mxu0 %v139
    %194 = vmatprep.subr.mxu0 0.0
    %195 = vmatpush2.msra.mxu0 0.0
    %196 = vmatprep.subr.mxu0 0.0
    %197 = vmatpush2.msra.mxu0 0.0
    %198 = vmatprep.subr.mxu0 0.0
    %199 = vmatpush2.msra.mxu0 0.0
    %200 = vmatprep.subr.mxu0 0.0
    %201 = vmatpush2.msra.mxu0 0.0
    %202 = vmatprep.subr.mxu0 0.0
    %203 = vmatpush2.msra.mxu0 0.0
    %204 = vmatprep.subr.mxu0 0.0
    %205 = vmatpush2.msra.mxu0 0.0
    %206 = vmatprep.subr.mxu0 0.0
    %207 = vmatpush2.msra.mxu0 0.0
    %208 = vmatprep.subr.mxu0 0.0
    %209 = vmatpush2.msra.mxu0 0.0
    %210 = vmatprep.subr.mxu0 0.0
    %211 = vmatpush2.msra.mxu0 0.0
    %212 = vmatprep.subr.mxu0 0.0
    %213 = vmatpush2.msra.mxu0 0.0
    %214 = vmatprep.subr.mxu0 0.0
    %215 = vmatpush2.msra.mxu0 0.0
    %216 = vmatprep.subr.mxu0 0.0
    %217 = vmatpush2.msra.mxu0 0.0
    %218 = vmatprep.subr.mxu0 0.0
    %219 = vmatpush2.msra.mxu0 0.0
    %220 = vmatprep.subr.mxu0 0.0
    %221 = vmatpush2.msra.mxu0 0.0
    %222 = vmatprep.subr.mxu0 0.0
    %223 = vmatpush2.msra.mxu0 0.0
    %224 = vmatprep.subr.mxu0 0.0
    %225 = vmatpush2.msra.mxu0 0.0
    %226 = vmatprep.mubr.f32.mxu0 0.0
    %227 = vmatmul.mubr.f32.gmra.mxu0 %v138
    %v228 = vpop.f32.mrf.mxu0
    %v229 = vadd.f32 %v160, %v228
    %v230 = vpop.f32.mrf.mxu0
    %231 = vdwg.mxu0
    %v232 = vtanh.pop %v229
    %v233 = vld [vmem:[%s5] sm:$0xff]
    %v234 = vld [vmem:[%s5 + $0x8] sm:$0xff]
    %v235 = vld [vmem:[%s5 + $0x10] sm:$0xff]
    %v236 = vld [vmem:[%s5 + $0x18] sm:$0xff]
    %v237 = vld [vmem:[%s5 + $0x20] sm:$0xff]
    %v238 = vld [vmem:[%s5 + $0x28] sm:$0xff]
    %v239 = vld [vmem:[%s5 + $0x30] sm:$0xff]
    %v240 = vld [vmem:[%s5 + $0x38] sm:$0xff]
    %v241 = vld [vmem:[%s5 + $0x40] sm:$0xff]
    %v242 = vld [vmem:[%s5 + $0x48] sm:$0xff]
    %v243 = vld [vmem:[%s5 + $0x50] sm:$0xff]
    %v244 = vld [vmem:[%s5 + $0x58] sm:$0xff]
    %v245 = vld [vmem:[%s5 + $0x60] sm:$0xff]
    %v246 = vld [vmem:[%s5 + $0x68] sm:$0xff]
    %v247 = vld [vmem:[%s5 + $0x70] sm:$0xff]
    %v248 = vld [vmem:[%s5 + $0x78] sm:$0xff]
    %v249 = vld [vmem:[#allocation4] sm:$0x1]
    %v251 = vlaneseq
    %v252 = vshrl.u32 %v251, 7
    %v253 = vsub.s32 0, %v252
    %v254 = vrot.slane %v249, %v253
    %256 = vmatprep.subr.mxu0 0.0
    %257 = vmatpush1.msra.mxu0 %v248
    %258 = vmatprep.subr.mxu0 0.0
    %259 = vmatpush1.msra.mxu0 %v247
    %260 = vmatprep.subr.mxu0 0.0
    %261 = vmatpush1.msra.mxu0 %v246
    %262 = vmatprep.subr.mxu0 0.0
    %263 = vmatpush1.msra.mxu0 %v245
    %264 = vmatprep.subr.mxu0 0.0
    %265 = vmatpush1.msra.mxu0 %v244
    %266 = vmatprep.subr.mxu0 0.0
    %267 = vmatpush1.msra.mxu0 %v243
    %268 = vmatprep.subr.mxu0 0.0
    %269 = vmatpush1.msra.mxu0 %v242
    %270 = vmatprep.subr.mxu0 0.0
    %271 = vmatpush1.msra.mxu0 %v241
    %272 = vmatprep.subr.mxu0 0.0
    %273 = vmatpush1.msra.mxu0 %v240
    %274 = vmatprep.subr.mxu0 0.0
    %275 = vmatpush1.msra.mxu0 %v239
    %276 = vmatprep.subr.mxu0 0.0
    %277 = vmatpush1.msra.mxu0 %v238
    %278 = vmatprep.subr.mxu0 0.0
    %279 = vmatpush1.msra.mxu0 %v237
    %280 = vmatprep.subr.mxu0 0.0
    %281 = vmatpush1.msra.mxu0 %v236
    %282 = vmatprep.subr.mxu0 0.0
    %283 = vmatpush1.msra.mxu0 %v235
    %284 = vmatprep.subr.mxu0 0.0
    %285 = vmatpush1.msra.mxu0 %v234
    %286 = vmatprep.subr.mxu0 0.0
    %287 = vmatpush1.msra.mxu0 %v233
    %288 = vmatprep.subr.mxu0 0.0
    %289 = vmatpush2.msra.mxu0 0.0
    %290 = vmatprep.subr.mxu0 0.0
    %291 = vmatpush2.msra.mxu0 0.0
    %292 = vmatprep.subr.mxu0 0.0
    %293 = vmatpush2.msra.mxu0 0.0
    %294 = vmatprep.subr.mxu0 0.0
    %295 = vmatpush2.msra.mxu0 0.0
    %296 = vmatprep.subr.mxu0 0.0
    %297 = vmatpush2.msra.mxu0 0.0
    %298 = vmatprep.subr.mxu0 0.0
    %299 = vmatpush2.msra.mxu0 0.0
    %300 = vmatprep.subr.mxu0 0.0
    %301 = vmatpush2.msra.mxu0 0.0
    %302 = vmatprep.subr.mxu0 0.0
    %303 = vmatpush2.msra.mxu0 0.0
    %304 = vmatprep.subr.mxu0 0.0
    %305 = vmatpush2.msra.mxu0 0.0
    %306 = vmatprep.subr.mxu0 0.0
    %307 = vmatpush2.msra.mxu0 0.0
    %308 = vmatprep.subr.mxu0 0.0
    %309 = vmatpush2.msra.mxu0 0.0
    %310 = vmatprep.subr.mxu0 0.0
    %311 = vmatpush2.msra.mxu0 0.0
    %312 = vmatprep.subr.mxu0 0.0
    %313 = vmatpush2.msra.mxu0 0.0
    %314 = vmatprep.subr.mxu0 0.0
    %315 = vmatpush2.msra.mxu0 0.0
    %316 = vmatprep.subr.mxu0 0.0
    %317 = vmatpush2.msra.mxu0 0.0
    %318 = vmatprep.subr.mxu0 0.0
    %319 = vmatpush2.msra.mxu0 0.0
    %320 = vmatprep.mubr.f32.mxu0 0.0
    %321 = vmatmul.mubr.f32.gmra.mxu0 %v232
    %v322 = vpop.f32.mrf.mxu0
    %v323 = vadd.f32 %v254, %v322
    %v324 = vpop.f32.mrf.mxu0
    %325 = vdwg.mxu0
    %vm326 = vcmask 64512
    %327 = vst.msk [vmem:[%s7] sm:$0xff] %vm326, %v323
    // Predicated region
    $region38: #{network_forward.1} parent=1 // pred_check
      _
    $region39: #{network_forward.1} parent=1 // pred_check_branch
      %329 = sbr.rel (0) target = $region41
    $region40: #{network_forward.1} parent=1 // pred_region
      _
    $region41: #{network_forward.1} parent=1 // pred_fallthru
      _
    // Predicated region
    $region42: #{network_forward.1} parent=1 // pred_check
      _
    $region43: #{network_forward.1} parent=1 // pred_check_branch
      %331 = sbr.rel (0) target = $region45
    $region44: #{network_forward.1} parent=1 // pred_region
      _
    $region45: #{network_forward.1} parent=1 // pred_fallthru
      _
    %332 = vsyncpa [#allocation3], 1
    %333 = vsyncpa [#allocation5], 1

</llo_original>
